<compile_context>
chip_gen: v5e
topology: v5e:2x2
jax: 0.10.0
libtpu: 0.0.40
codegen_flags: <defaults>
</compile_context>

<pallas_src>
import functools

import jax
import jax.numpy as jnp
from jax.experimental import pallas as pl
from jax.experimental.pallas import tpu as pltpu

LANE = 128     # lane (last-dim) tile
SUBLANE = 8    # sublane (second-to-last dim) tile
TB_MAX = 256   # batch-tile cap (safe vs. v5e vreg spills; large enough to amortize grid overhead)


def _round_up(n, m):
    return ((n + m - 1) // m) * m


def _mlp_body(x_f32, w0_bf16, b0_f32, hidden_pairs, wp_bf16, bp_f32):
    """MXU matmuls in bf16 with f32 accumulation; bias-add/ReLU in f32."""
    h = jnp.dot(x_f32.astype(jnp.bfloat16), w0_bf16, preferred_element_type=jnp.float32)
    h = jnp.maximum(h + b0_f32, 0.0)
    # Dropout is identity at inference.
    for (w, b) in hidden_pairs:  # static unroll; padded lanes stay exactly zero
        h = jnp.dot(h.astype(jnp.bfloat16), w, preferred_element_type=jnp.float32)
        h = jnp.maximum(h + b, 0.0)
    return jnp.dot(h.astype(jnp.bfloat16), wp_bf16, preferred_element_type=jnp.float32) + bp_f32


def _mlp_kernel(x_ref, w0_ref, b0_ref, wh_ref, bh_ref, wp_ref, bp_ref, o_ref,
                *, num_hidden: int):
    """x_ref: [TB, Din]  w0_ref: [Din, H_p] bf16  b0_ref: [1, H_p] f32
    wh_ref: [L, H_p, H_p] bf16  bh_ref: [L, 1, H_p] f32
    wp_ref: [H_p, C_p] bf16     bp_ref: [1, C_p] f32   o_ref: [TB, C_p] f32."""
    hidden = [(wh_ref[l], bh_ref[l]) for l in range(num_hidden)]
    y = _mlp_body(x_ref[...], w0_ref[...], b0_ref[...], hidden, wp_ref[...], bp_ref[...])
    o_ref[...] = y.astype(o_ref.dtype)


def _mlp_kernel_nohidden(x_ref, w0_ref, b0_ref, wp_ref, bp_ref, o_ref):
    y = _mlp_body(x_ref[...], w0_ref[...], b0_ref[...], (), wp_ref[...], bp_ref[...])
    o_ref[...] = y.astype(o_ref.dtype)


def init_net1_params(key, input_dim, num_class, bottle_neck, fc_layer_num):
    """Logical (unpadded, f32) params matching Net1's layers: list of (W [in,out], b [1,out])."""
    layers = []
    dims = [(input_dim, bottle_neck)]
    for _ in range(fc_layer_num):
        dims.append((bottle_neck, bottle_neck))
    dims.append((bottle_neck, num_class))  # predictor

    for (din, dout) in dims:
        key, kw, kb = jax.random.split(key, 3)
        bound = 1.0 / jnp.sqrt(jnp.float32(din))
        w = jax.random.uniform(kw, (din, dout), jnp.float32, -bound, bound)
        b = jax.random.uniform(kb, (1, dout), jnp.float32, -bound, bound)
        layers.append((w, b))
    return layers


def pack_net1_params(params, input_dim, num_class, bottle_neck):
    """One-time packing: lane-pad feature outputs to 128, stack hidden layers, cast W to bf16."""
    h_p = _round_up(bottle_neck, LANE)
    c_p = _round_up(num_class, LANE)

    (w0, b0), *hidden, (wp, bp) = params
    num_hidden = len(hidden)

    w0p = jnp.zeros((input_dim, h_p), jnp.float32).at[:, :bottle_neck].set(w0).astype(jnp.bfloat16)
    b0p = jnp.zeros((1, h_p), jnp.float32).at[:, :bottle_neck].set(b0)

    if num_hidden:
        whp = jnp.zeros((num_hidden, h_p, h_p), jnp.float32)
        bhp = jnp.zeros((num_hidden, 1, h_p), jnp.float32)
        for l, (w, b) in enumerate(hidden):
            whp = whp.at[l, :bottle_neck, :bottle_neck].set(w)
            bhp = bhp.at[l, :, :bottle_neck].set(b)
        whp = whp.astype(jnp.bfloat16)
    else:
        whp, bhp = None, None

    wpp = jnp.zeros((h_p, c_p), jnp.float32).at[:bottle_neck, :num_class].set(wp).astype(jnp.bfloat16)
    bpp = jnp.zeros((1, c_p), jnp.float32).at[:, :num_class].set(bp)

    return (w0p, b0p, whp, bhp, wpp, bpp), num_hidden


@functools.partial(jax.jit, static_argnames=("num_hidden", "num_class"))
def net1_forward(x, packed, *, num_hidden, num_class):
    """Single fused pallas_call over a batch grid; returns [B, num_class] f32."""
    w0p, b0p, whp, bhp, wpp, bpp = packed
    B, din = x.shape
    h_p = w0p.shape[1]
    c_p = wpp.shape[1]

    # Batch tiling: sublane-aligned, >=2 grid steps when B allows it (feeds both
    # v7x TensorCores via dimension_semantics=("parallel",)), capped at TB_MAX.
    b_al = _round_up(B, SUBLANE)
    tb = min(TB_MAX, max(SUBLANE, _round_up(pl.cdiv(b_al, 2), SUBLANE)))
    grid = (pl.cdiv(b_al, tb),)

    # Cheap sublane alignment only when needed (no full zeros+scatter pad pass).
    xb = x if b_al == B else jnp.pad(x, ((0, b_al - B), (0, 0)))

    if num_hidden > 0:
        kernel = functools.partial(_mlp_kernel, num_hidden=num_hidden)
        l_eff = whp.shape[0]
        weight_args = (w0p, b0p, whp, bhp, wpp, bpp)
        weight_specs = [
            pl.BlockSpec((din, h_p), lambda i: (0, 0)),            # W0 (bf16), VMEM-resident
            pl.BlockSpec((1, h_p), lambda i: (0, 0)),              # b0 (f32)
            pl.BlockSpec((l_eff, h_p, h_p), lambda i: (0, 0, 0)),  # hidden W stack (bf16)
            pl.BlockSpec((l_eff, 1, h_p), lambda i: (0, 0, 0)),    # hidden b stack (f32)
            pl.BlockSpec((h_p, c_p), lambda i: (0, 0)),            # predictor W (bf16)
            pl.BlockSpec((1, c_p), lambda i: (0, 0)),              # predictor b (f32)
        ]
    else:
        kernel = _mlp_kernel_nohidden
        weight_args = (w0p, b0p, wpp, bpp)
        weight_specs = [
            pl.BlockSpec((din, h_p), lambda i: (0, 0)),
            pl.BlockSpec((1, h_p), lambda i: (0, 0)),
            pl.BlockSpec((h_p, c_p), lambda i: (0, 0)),
            pl.BlockSpec((1, c_p), lambda i: (0, 0)),
        ]

    # VMEM budget: double-buffered weights + io tiles + f32 activation headroom,
    # clamped to 48 MiB so it stays inside v7x's 64 MiB physical VMEM.
    weight_bytes = sum(int(a.size) * a.dtype.itemsize for a in weight_args)
    io_bytes = (tb * din + tb * c_p) * 4
    vmem_limit = int(min(max(32 << 20, 2 * (weight_bytes + io_bytes) + 4 * tb * h_p * 4), 48 << 20))

    out_p = pl.pallas_call(
        kernel,
        out_shape=jax.ShapeDtypeStruct((b_al, c_p), jnp.float32),
        grid_spec=pltpu.PrefetchScalarGridSpec(
            num_scalar_prefetch=0,
            grid=grid,
            in_specs=[pl.BlockSpec((tb, din), lambda i: (i, 0))] + weight_specs,
            out_specs=pl.BlockSpec((tb, c_p), lambda i: (i, 0)),   # lane-dense output
        ),
        compiler_params=pltpu.CompilerParams(
            dimension_semantics=("parallel",),  # batch axis shards across TensorCores
            vmem_limit_bytes=vmem_limit,
        ),
    )(xb, *weight_args)

    return out_p[:B, :num_class]


if __name__ == "__main__":
    # Small, module-consistent shapes.
    batch = 8
    input_dim = 32
    bottle_neck = 32
    num_class = 8
    fc_layer_num = 2
    prob_drop = 0.1  # identity at inference

    key = jax.random.PRNGKey(0)
    key_x, key_p = jax.random.split(key)
    x = jax.random.normal(key_x, (batch, input_dim), dtype=jnp.float32)

    params = init_net1_params(key_p, input_dim, num_class, bottle_neck, fc_layer_num)
    packed, num_hidden = pack_net1_params(params, input_dim, num_class, bottle_neck)

    out = net1_forward(x, packed, num_hidden=num_hidden, num_class=num_class)
    out = jax.block_until_ready(out)
    assert out.shape == (batch, num_class), out.shape

    # Pure-JAX f32 reference (tolerance covers the bf16 weight/activation cast in the kernel).
    ref = x
    for (w, b) in params[:-1]:
        ref = jnp.maximum(ref @ w + b, 0.0)
    w_pred, b_pred = params[-1]
    ref = ref @ w_pred + b_pred
    assert jnp.allclose(out, ref, atol=2e-2, rtol=2e-2), float(jnp.max(jnp.abs(out - ref)))

    print("KERNEL_OK")
</pallas_src>

<mosaic_0001>
module attributes {stable_mosaic.version = 11 : i64} {
  func.func @_mlp_kernel(%arg0: i32, %arg1: memref<8x32xf32, #tpu.memory_space<vmem>>, %arg2: memref<32x128xbf16, #tpu.memory_space<vmem>>, %arg3: memref<1x128xf32, #tpu.memory_space<vmem>>, %arg4: memref<2x128x128xbf16, #tpu.memory_space<vmem>>, %arg5: memref<2x1x128xf32, #tpu.memory_space<vmem>>, %arg6: memref<128x128xbf16, #tpu.memory_space<vmem>>, %arg7: memref<1x128xf32, #tpu.memory_space<vmem>>, %arg8: memref<8x128xf32, #tpu.memory_space<vmem>>) attributes {dimension_semantics = [#tpu.dimension_semantics<parallel>], iteration_bounds = array<i64: 1>, scalar_prefetch = 0 : i64, scratch_operands = 0 : i64, tpu.core_type = #tpu.core_type<tc>, window_params = [{transform_indices = @transform_0, window_bounds = array<i64: 8, 32>}, {pipeline_mode = #tpu.pipeline_mode<synchronous>, transform_indices = @transform_1, window_bounds = array<i64: 32, 128>}, {pipeline_mode = #tpu.pipeline_mode<synchronous>, transform_indices = @transform_2, window_bounds = array<i64: 1, 128>}, {pipeline_mode = #tpu.pipeline_mode<synchronous>, transform_indices = @transform_3, window_bounds = array<i64: 2, 128, 128>}, {pipeline_mode = #tpu.pipeline_mode<synchronous>, transform_indices = @transform_4, window_bounds = array<i64: 2, 1, 128>}, {pipeline_mode = #tpu.pipeline_mode<synchronous>, transform_indices = @transform_5, window_bounds = array<i64: 128, 128>}, {pipeline_mode = #tpu.pipeline_mode<synchronous>, transform_indices = @transform_6, window_bounds = array<i64: 1, 128>}, {transform_indices = @transform_7, window_bounds = array<i64: 8, 128>}]} {
    %c0 = arith.constant 0 : index
    %c0_0 = arith.constant 0 : index
    %c0_1 = arith.constant 0 : index
    %0 = vector.load %arg4[%c0, %c0_0, %c0_1] : memref<2x128x128xbf16, #tpu.memory_space<vmem>>, vector<1x128x128xbf16>
    %1 = vector.shape_cast %0 : vector<1x128x128xbf16> to vector<128x128xbf16>
    %c0_2 = arith.constant 0 : index
    %c0_3 = arith.constant 0 : index
    %c0_4 = arith.constant 0 : index
    %2 = vector.load %arg5[%c0_2, %c0_3, %c0_4] : memref<2x1x128xf32, #tpu.memory_space<vmem>>, vector<1x1x128xf32>
    %3 = vector.shape_cast %2 : vector<1x1x128xf32> to vector<1x128xf32>
    %c1 = arith.constant 1 : index
    %c0_5 = arith.constant 0 : index
    %c0_6 = arith.constant 0 : index
    %4 = vector.load %arg4[%c1, %c0_5, %c0_6] : memref<2x128x128xbf16, #tpu.memory_space<vmem>>, vector<1x128x128xbf16>
    %5 = vector.shape_cast %4 : vector<1x128x128xbf16> to vector<128x128xbf16>
    %c1_7 = arith.constant 1 : index
    %c0_8 = arith.constant 0 : index
    %c0_9 = arith.constant 0 : index
    %6 = vector.load %arg5[%c1_7, %c0_8, %c0_9] : memref<2x1x128xf32, #tpu.memory_space<vmem>>, vector<1x1x128xf32>
    %7 = vector.shape_cast %6 : vector<1x1x128xf32> to vector<1x128xf32>
    %c0_10 = arith.constant 0 : index
    %c0_11 = arith.constant 0 : index
    %8 = vector.load %arg1[%c0_10, %c0_11] : memref<8x32xf32, #tpu.memory_space<vmem>>, vector<8x32xf32>
    %c0_12 = arith.constant 0 : index
    %c0_13 = arith.constant 0 : index
    %9 = vector.load %arg2[%c0_12, %c0_13] : memref<32x128xbf16, #tpu.memory_space<vmem>>, vector<32x128xbf16>
    %c0_14 = arith.constant 0 : index
    %c0_15 = arith.constant 0 : index
    %10 = vector.load %arg3[%c0_14, %c0_15] : memref<1x128xf32, #tpu.memory_space<vmem>>, vector<1x128xf32>
    %c0_16 = arith.constant 0 : index
    %c0_17 = arith.constant 0 : index
    %11 = vector.load %arg6[%c0_16, %c0_17] : memref<128x128xbf16, #tpu.memory_space<vmem>>, vector<128x128xbf16>
    %c0_18 = arith.constant 0 : index
    %c0_19 = arith.constant 0 : index
    %12 = vector.load %arg7[%c0_18, %c0_19] : memref<1x128xf32, #tpu.memory_space<vmem>>, vector<1x128xf32>
    %13 = arith.truncf %8 : vector<8x32xf32> to vector<8x32xbf16>
    %cst = arith.constant dense<0.000000e+00> : vector<8x128xf32>
    %14 = tpu.matmul %13, %9, %cst {dimension_numbers = #tpu.dot_dimension_numbers<[1], [0], [0], [1], [0, 0, 1, 1], [], []>} : vector<8x32xbf16>, vector<32x128xbf16>, vector<8x128xf32> -> vector<8x128xf32>
    %15 = vector.broadcast %10 : vector<1x128xf32> to vector<8x128xf32>
    %16 = arith.addf %14, %15 : vector<8x128xf32>
    %cst_20 = arith.constant 0.000000e+00 : f32
    %17 = vector.broadcast %cst_20 : f32 to vector<8x128xf32>
    %18 = arith.maximumf %16, %17 : vector<8x128xf32>
    %19 = arith.truncf %18 : vector<8x128xf32> to vector<8x128xbf16>
    %cst_21 = arith.constant dense<0.000000e+00> : vector<8x128xf32>
    %20 = tpu.matmul %19, %1, %cst_21 {dimension_numbers = #tpu.dot_dimension_numbers<[1], [0], [0], [1], [0, 0, 1, 1], [], []>} : vector<8x128xbf16>, vector<128x128xbf16>, vector<8x128xf32> -> vector<8x128xf32>
    %21 = vector.broadcast %3 : vector<1x128xf32> to vector<8x128xf32>
    %22 = arith.addf %20, %21 : vector<8x128xf32>
    %cst_22 = arith.constant 0.000000e+00 : f32
    %23 = vector.broadcast %cst_22 : f32 to vector<8x128xf32>
    %24 = arith.maximumf %22, %23 : vector<8x128xf32>
    %25 = arith.truncf %24 : vector<8x128xf32> to vector<8x128xbf16>
    %cst_23 = arith.constant dense<0.000000e+00> : vector<8x128xf32>
    %26 = tpu.matmul %25, %5, %cst_23 {dimension_numbers = #tpu.dot_dimension_numbers<[1], [0], [0], [1], [0, 0, 1, 1], [], []>} : vector<8x128xbf16>, vector<128x128xbf16>, vector<8x128xf32> -> vector<8x128xf32>
    %27 = vector.broadcast %7 : vector<1x128xf32> to vector<8x128xf32>
    %28 = arith.addf %26, %27 : vector<8x128xf32>
    %cst_24 = arith.constant 0.000000e+00 : f32
    %29 = vector.broadcast %cst_24 : f32 to vector<8x128xf32>
    %30 = arith.maximumf %28, %29 : vector<8x128xf32>
    %31 = arith.truncf %30 : vector<8x128xf32> to vector<8x128xbf16>
    %cst_25 = arith.constant dense<0.000000e+00> : vector<8x128xf32>
    %32 = tpu.matmul %31, %11, %cst_25 {dimension_numbers = #tpu.dot_dimension_numbers<[1], [0], [0], [1], [0, 0, 1, 1], [], []>} : vector<8x128xbf16>, vector<128x128xbf16>, vector<8x128xf32> -> vector<8x128xf32>
    %33 = vector.broadcast %12 : vector<1x128xf32> to vector<8x128xf32>
    %34 = arith.addf %32, %33 : vector<8x128xf32>
    %c0_26 = arith.constant 0 : index
    %c0_27 = arith.constant 0 : index
    %35 = vector.load %arg8[%c0_26, %c0_27] : memref<8x128xf32, #tpu.memory_space<vmem>>, vector<8x128xf32>
    tpu.vector_store %arg8[%c0_26, %c0_27], %34 {strides = array<i32>} : memref<8x128xf32, #tpu.memory_space<vmem>>, vector<8x128xf32>,
    return
  }
  func.func @transform_0(%arg0: i32) -> (i32, i32) {
    %c0_i32 = arith.constant 0 : i32
    %c0_i32_0 = arith.constant 0 : i32
    return %arg0, %c0_i32 : i32, i32
  }
  func.func @transform_1(%arg0: i32) -> (i32, i32) {
    %c0_i32 = arith.constant 0 : i32
    %c0_i32_0 = arith.constant 0 : i32
    %c0_i32_1 = arith.constant 0 : i32
    return %c0_i32, %c0_i32_0 : i32, i32
  }
  func.func @transform_2(%arg0: i32) -> (i32, i32) {
    %c0_i32 = arith.constant 0 : i32
    %c0_i32_0 = arith.constant 0 : i32
    %c0_i32_1 = arith.constant 0 : i32
    return %c0_i32, %c0_i32_0 : i32, i32
  }
  func.func @transform_3(%arg0: i32) -> (i32, i32, i32) {
    %c0_i32 = arith.constant 0 : i32
    %c0_i32_0 = arith.constant 0 : i32
    %c0_i32_1 = arith.constant 0 : i32
    %c0_i32_2 = arith.constant 0 : i32
    return %c0_i32, %c0_i32_0, %c0_i32_1 : i32, i32, i32
  }
  func.func @transform_4(%arg0: i32) -> (i32, i32, i32) {
    %c0_i32 = arith.constant 0 : i32
    %c0_i32_0 = arith.constant 0 : i32
    %c0_i32_1 = arith.constant 0 : i32
    %c0_i32_2 = arith.constant 0 : i32
    return %c0_i32, %c0_i32_0, %c0_i32_1 : i32, i32, i32
  }
  func.func @transform_5(%arg0: i32) -> (i32, i32) {
    %c0_i32 = arith.constant 0 : i32
    %c0_i32_0 = arith.constant 0 : i32
    %c0_i32_1 = arith.constant 0 : i32
    return %c0_i32, %c0_i32_0 : i32, i32
  }
  func.func @transform_6(%arg0: i32) -> (i32, i32) {
    %c0_i32 = arith.constant 0 : i32
    %c0_i32_0 = arith.constant 0 : i32
    %c0_i32_1 = arith.constant 0 : i32
    return %c0_i32, %c0_i32_0 : i32, i32
  }
  func.func @transform_7(%arg0: i32) -> (i32, i32) {
    %c0_i32 = arith.constant 0 : i32
    %c0_i32_0 = arith.constant 0 : i32
    return %arg0, %c0_i32 : i32, i32
  }
}

</mosaic_0001>

<llo_original>
// kernel: net1_forward.1
$region0: #{net1_forward.1}
  #allocation0 [shape = 'u32[]', space=smem, size = 0x4, offset = 0x4, fixed_abs, tag = 'smem constant byte address 0x4 - core index']
  #allocation1 [shape = 'u32[72,128]{1,0:T(1,128)}', space=vmem, size = 0x9000, scoped, tag = 'internal scratch']
  %s0 = inlined_call_operand.hbm [shape: f32[8,32], index: 0, kind: input, shape index: {}]
  %s1 = inlined_call_operand.hbm [shape: bf16[32,128], index: 1, kind: input, shape index: {}]
  %s2 = inlined_call_operand.vmem [shape: f32[1,128], index: 2, kind: input, shape index: {}]
  %s3 = inlined_call_operand.hbm [shape: bf16[2,128,128], index: 3, kind: input, shape index: {}]
  %s4 = inlined_call_operand.vmem [shape: f32[2,1,128], index: 4, kind: input, shape index: {}]
  %s5 = inlined_call_operand.hbm [shape: bf16[128,128], index: 5, kind: input, shape index: {}]
  %s6 = inlined_call_operand.vmem [shape: f32[1,128], index: 6, kind: input, shape index: {}]
  %s7 = inlined_call_operand.hbm [shape: f32[8,128], index: 7, kind: output, shape index: {}]
  %s8 = sld [smem:[#allocation0]]
  $region54: #{net1_forward.1} parent=0
    _
  %s10 = ssub.s32 1, %s8
  %s11 = scalar_select 0, %s10, %s8
  $region1: #{net1_forward.1} parent=0
    #allocation2 [shape = 'u8[4096]{0}', space=vmem, size = 0x1000, scoped, tag = 'input window, operand 0, single buffered']
    #allocation3 [shape = 's32[1]{0}', space=sflag, size = 0x4, scoped, tag = 'scoped memory for net1_forward.1']
    #allocation4 [shape = 's32[1]{0}', space=sflag, size = 0x4, scoped, tag = 'scoped memory for net1_forward.1']
    #allocation5 [shape = 'u8[8192]{0}', space=vmem, size = 0x2000, scoped, tag = 'input window, operand 1, single buffered']
    #allocation6 [shape = 's32[1]{0}', space=sflag, size = 0x4, scoped, tag = 'scoped memory for net1_forward.1']
    #allocation7 [shape = 'u8[65536]{0}', space=vmem, size = 0x10000, scoped, tag = 'input window, operand 3, single buffered']
    #allocation8 [shape = 'u8[32768]{0}', space=vmem, size = 0x8000, scoped, tag = 'input window, operand 5, single buffered']
    #allocation9 [shape = 's32[1]{0}', space=sflag, size = 0x4, scoped, tag = 'scoped memory for net1_forward.1']
    #allocation10 [shape = 'u8[4096]{0}', space=vmem, size = 0x1000, scoped, tag = 'output window, operand 0, single buffered']
    %12 = vsyncpa [#allocation3], 0
    %13 = vsyncpa [#allocation6], 0
    %14 = vsyncpa [#allocation9], 0
    %15 = vsyncpa [#allocation4], 0
    // Predicated region
    $region2: #{net1_forward.1} parent=1 // pred_check
      _
    $region3: #{net1_forward.1} parent=1 // pred_check_branch
      %17 = sbr.rel (0) target = $region5
    $region4: #{net1_forward.1} parent=1 // pred_region
      %19 = vsyncadd [#allocation3], 0
      %s21 = sshll.u32 %s0, 4
      %s22 = int_to_ptr.hbm [resolvable:$true] %s21
      %s23 = sshll.u32 [#allocation2], 4
      %s24 = int_to_ptr.vmem [resolvable:$true] %s23
      %26 = dma.hbm_to_vmem [thread:$0]  %s22, 128, %s24, [#allocation3]
    $region5: #{net1_forward.1} parent=1 // pred_fallthru
      _
    // Predicated region
    $region6: #{net1_forward.1} parent=1 // pred_check
      _
    $region7: #{net1_forward.1} parent=1 // pred_check_branch
      %28 = sbr.rel (0) target = $region9
    $region8: #{net1_forward.1} parent=1 // pred_region
      %30 = vsyncadd [#allocation6], 0
      %s31 = sshll.u32 %s1, 4
      %s32 = int_to_ptr.hbm [resolvable:$true] %s31
      %s33 = sshll.u32 [#allocation5], 4
      %s34 = int_to_ptr.vmem [resolvable:$true] %s33
      %39 = dma.hbm_to_vmem [thread:$0]  %s32, 256, %s34, [#allocation6], 64, 64, 4
    $region9: #{net1_forward.1} parent=1 // pred_fallthru
      _
    // Predicated region
    $region10: #{net1_forward.1} parent=1 // pred_check
      _
    $region11: #{net1_forward.1} parent=1 // pred_check_branch
      %41 = sbr.rel (0) target = $region13
    $region12: #{net1_forward.1} parent=1 // pred_region
      _
    $region13: #{net1_forward.1} parent=1 // pred_fallthru
      _
    // Predicated region
    $region14: #{net1_forward.1} parent=1 // pred_check
      _
    $region15: #{net1_forward.1} parent=1 // pred_check_branch
      %43 = sbr.rel (0) target = $region17
    $region16: #{net1_forward.1} parent=1 // pred_region
      %45 = vsyncadd [#allocation6], 0
      %s46 = sshll.u32 %s3, 4
      %s47 = int_to_ptr.hbm [resolvable:$true] %s46
      %s48 = sshll.u32 [#allocation7], 4
      %s49 = int_to_ptr.vmem [resolvable:$true] %s48
      %54 = dma.hbm_to_vmem [thread:$0]  %s47, 2048, %s49, [#allocation6], 64, 64, 4
    $region17: #{net1_forward.1} parent=1 // pred_fallthru
      _
    // Predicated region
    $region18: #{net1_forward.1} parent=1 // pred_check
      _
    $region19: #{net1_forward.1} parent=1 // pred_check_branch
      %56 = sbr.rel (0) target = $region21
    $region20: #{net1_forward.1} parent=1 // pred_region
      _
    $region21: #{net1_forward.1} parent=1 // pred_fallthru
      _
    // Predicated region
    $region22: #{net1_forward.1} parent=1 // pred_check
      _
    $region23: #{net1_forward.1} parent=1 // pred_check_branch
      %58 = sbr.rel (0) target = $region25
    $region24: #{net1_forward.1} parent=1 // pred_region
      %60 = vsyncadd [#allocation9], 0
      %s61 = sshll.u32 %s5, 4
      %s62 = int_to_ptr.hbm [resolvable:$true] %s61
      %s63 = sshll.u32 [#allocation8], 4
      %s64 = int_to_ptr.vmem [resolvable:$true] %s63
      %69 = dma.hbm_to_vmem [thread:$0]  %s62, 1024, %s64, [#allocation9], 64, 64, 4
    $region25: #{net1_forward.1} parent=1 // pred_fallthru
      _
    // Predicated region
    $region26: #{net1_forward.1} parent=1 // pred_check
      _
    $region27: #{net1_forward.1} parent=1 // pred_check_branch
      %71 = sbr.rel (0) target = $region29
    $region28: #{net1_forward.1} parent=1 // pred_region
      _
    $region29: #{net1_forward.1} parent=1 // pred_fallthru
      _
    // Predicated region
    $region30: #{net1_forward.1} parent=1 // pred_check
      _
    $region31: #{net1_forward.1} parent=1 // pred_check_branch
      %73 = sbr.rel (0) target = $region33
    $region32: #{net1_forward.1} parent=1 // pred_region
      %75 = dma.done [#allocation3], 128
    $region33: #{net1_forward.1} parent=1 // pred_fallthru
      _
    // Predicated region
    $region34: #{net1_forward.1} parent=1 // pred_check
      _
    $region35: #{net1_forward.1} parent=1 // pred_check_branch
      %77 = sbr.rel (0) target = $region37
    $region36: #{net1_forward.1} parent=1 // pred_region
      %79 = dma.done [#allocation6], 256
    $region37: #{net1_forward.1} parent=1 // pred_fallthru
      _
    // Predicated region
    $region38: #{net1_forward.1} parent=1 // pred_check
      _
    $region39: #{net1_forward.1} parent=1 // pred_check_branch
      %81 = sbr.rel (0) target = $region41
    $region40: #{net1_forward.1} parent=1 // pred_region
      %83 = dma.done [#allocation6], 2048
    $region41: #{net1_forward.1} parent=1 // pred_fallthru
      _
    // Predicated region
    $region42: #{net1_forward.1} parent=1 // pred_check
      _
    $region43: #{net1_forward.1} parent=1 // pred_check_branch
      %85 = sbr.rel (0) target = $region45
    $region44: #{net1_forward.1} parent=1 // pred_region
      %87 = dma.done [#allocation9], 1024
    $region45: #{net1_forward.1} parent=1 // pred_fallthru
      _
    %v89 = vld [vmem:[#allocation7] sm:$0xf]
    %v90 = vld [vmem:[#allocation7 + $0x4] sm:$0xf]
    %v91 = vld [vmem:[#allocation7 + $0x8] sm:$0xf]
    %v92 = vld [vmem:[#allocation7 + $0xc] sm:$0xf]
    %v93 = vld [vmem:[#allocation7 + $0x10] sm:$0xf]
    %v94 = vld [vmem:[#allocation7 + $0x14] sm:$0xf]
    %v95 = vld [vmem:[#allocation7 + $0x18] sm:$0xf]
    %v96 = vld [vmem:[#allocation7 + $0x1c] sm:$0xf]
    %v97 = vld [vmem:[#allocation7 + $0x20] sm:$0xf]
    %v98 = vld [vmem:[#allocation7 + $0x24] sm:$0xf]
    %v99 = vld [vmem:[#allocation7 + $0x28] sm:$0xf]
    %v100 = vld [vmem:[#allocation7 + $0x2c] sm:$0xf]
    %v101 = vld [vmem:[#allocation7 + $0x30] sm:$0xf]
    %v102 = vld [vmem:[#allocation7 + $0x34] sm:$0xf]
    %v103 = vld [vmem:[#allocation7 + $0x38] sm:$0xf]
    %v104 = vld [vmem:[#allocation7 + $0x3c] sm:$0xf]
    %v105 = vld [vmem:[%s4] sm:$0x1]
    %s106 = scalar_lea.vmem [#allocation7], 64
    %v107 = vld [vmem:[%s106] sm:$0xf]
    %v108 = vld [vmem:[%s106 + $0x4] sm:$0xf]
    %v109 = vld [vmem:[%s106 + $0x8] sm:$0xf]
    %v110 = vld [vmem:[%s106 + $0xc] sm:$0xf]
    %v111 = vld [vmem:[%s106 + $0x10] sm:$0xf]
    %v112 = vld [vmem:[%s106 + $0x14] sm:$0xf]
    %v113 = vld [vmem:[%s106 + $0x18] sm:$0xf]
    %v114 = vld [vmem:[%s106 + $0x1c] sm:$0xf]
    %v115 = vld [vmem:[%s106 + $0x20] sm:$0xf]
    %v116 = vld [vmem:[%s106 + $0x24] sm:$0xf]
    %v117 = vld [vmem:[%s106 + $0x28] sm:$0xf]
    %v118 = vld [vmem:[%s106 + $0x2c] sm:$0xf]
    %v119 = vld [vmem:[%s106 + $0x30] sm:$0xf]
    %v120 = vld [vmem:[%s106 + $0x34] sm:$0xf]
    %v121 = vld [vmem:[%s106 + $0x38] sm:$0xf]
    %v122 = vld [vmem:[%s106 + $0x3c] sm:$0xf]
    %s123 = scalar_lea.vmem %s4, 1
    %v124 = vld [vmem:[%s123] sm:$0x1]
    %v125 = vld [vmem:[#allocation2] sm:$0xff]
    %v126 = vld [vmem:[#allocation5] sm:$0xf]
    %v127 = vld [vmem:[#allocation5 + $0x4] sm:$0xf]
    %v128 = vld [vmem:[#allocation5 + $0x8] sm:$0xf]
    %v129 = vld [vmem:[#allocation5 + $0xc] sm:$0xf]
    %v130 = vld [vmem:[%s2] sm:$0x1]
    %v131 = vld [vmem:[#allocation8] sm:$0xf]
    %v132 = vld [vmem:[#allocation8 + $0x4] sm:$0xf]
    %v133 = vld [vmem:[#allocation8 + $0x8] sm:$0xf]
    %v134 = vld [vmem:[#allocation8 + $0xc] sm:$0xf]
    %v135 = vld [vmem:[#allocation8 + $0x10] sm:$0xf]
    %v136 = vld [vmem:[#allocation8 + $0x14] sm:$0xf]
    %v137 = vld [vmem:[#allocation8 + $0x18] sm:$0xf]
    %v138 = vld [vmem:[#allocation8 + $0x1c] sm:$0xf]
    %v139 = vld [vmem:[#allocation8 + $0x20] sm:$0xf]
    %v140 = vld [vmem:[#allocation8 + $0x24] sm:$0xf]
    %v141 = vld [vmem:[#allocation8 + $0x28] sm:$0xf]
    %v142 = vld [vmem:[#allocation8 + $0x2c] sm:$0xf]
    %v143 = vld [vmem:[#allocation8 + $0x30] sm:$0xf]
    %v144 = vld [vmem:[#allocation8 + $0x34] sm:$0xf]
    %v145 = vld [vmem:[#allocation8 + $0x38] sm:$0xf]
    %v146 = vld [vmem:[#allocation8 + $0x3c] sm:$0xf]
    %v147 = vld [vmem:[%s6] sm:$0x1]
    %v148 = vpack.c.bf16 %v125, %v125
    %v150 = vperm.slane %v130, 0
    %v156 = vunpack.c.l.b16 %v126
    %v157 = vunpack.c.l.b16 %v127
    %v158 = vunpack.c.l.b16 %v128
    %v159 = vunpack.c.l.b16 %v129
    %v160 = vpack.c.b16 %v157, %v156
    %v161 = vpack.c.b16 %v159, %v158
    %vm164 = vcmask 261120
    %v166 = vsel %vm164, %v148, 0
    %168 = vmatpush.bf16.msra.mxu0 0
    %169 = vmatpush.bf16.msra.mxu0 0
    %170 = vmatpush.bf16.msra.mxu0 0
    %171 = vmatpush.bf16.msra.mxu0 0
    %172 = vmatpush.bf16.msra.mxu0 0
    %173 = vmatpush.bf16.msra.mxu0 0
    %174 = vmatpush.bf16.msra.mxu0 %v161
    %175 = vmatpush.bf16.msra.mxu0 %v160
    %176 = vmatmul.bf16.gmra.mxu0 %v166
    %v177 = vpop.f32.mrf.mxu0
    %v178 = vadd.f32 %v150, %v177
    %v179 = vpop.f32.mrf.mxu0
    %180 = vdwg.mxu0
    %v181 = vmax.f32 %v178, 0.0
    %v182 = vpack.c.bf16 %v181, %v181
    %v184 = vperm.slane %v105, 0
    %v202 = vunpack.c.l.b16 %v89
    %v203 = vunpack.c.l.b16 %v90
    %v204 = vunpack.c.l.b16 %v91
    %v205 = vunpack.c.l.b16 %v92
    %v206 = vunpack.c.l.b16 %v93
    %v207 = vunpack.c.l.b16 %v94
    %v208 = vunpack.c.l.b16 %v95
    %v209 = vunpack.c.l.b16 %v96
    %v210 = vunpack.c.l.b16 %v97
    %v211 = vunpack.c.l.b16 %v98
    %v212 = vunpack.c.l.b16 %v99
    %v213 = vunpack.c.l.b16 %v100
    %v214 = vunpack.c.l.b16 %v101
    %v215 = vunpack.c.l.b16 %v102
    %v216 = vunpack.c.l.b16 %v103
    %v217 = vunpack.c.l.b16 %v104
    %v218 = vpack.c.b16 %v203, %v202
    %v219 = vpack.c.b16 %v205, %v204
    %v220 = vpack.c.b16 %v207, %v206
    %v221 = vpack.c.b16 %v209, %v208
    %v222 = vpack.c.b16 %v211, %v210
    %v223 = vpack.c.b16 %v213, %v212
    %v224 = vpack.c.b16 %v215, %v214
    %v225 = vpack.c.b16 %v217, %v216
    %234 = vmatpush.bf16.msra.mxu0 %v225
    %235 = vmatpush.bf16.msra.mxu0 %v224
    %236 = vmatpush.bf16.msra.mxu0 %v223
    %237 = vmatpush.bf16.msra.mxu0 %v222
    %238 = vmatpush.bf16.msra.mxu0 %v221
    %239 = vmatpush.bf16.msra.mxu0 %v220
    %240 = vmatpush.bf16.msra.mxu0 %v219
    %241 = vmatpush.bf16.msra.mxu0 %v218
    %242 = vmatmul.bf16.gmra.mxu0 %v182
    %v243 = vpop.f32.mrf.mxu0
    %v244 = vadd.f32 %v184, %v243
    %v245 = vpop.f32.mrf.mxu0
    %246 = vdwg.mxu0
    %v247 = vmax.f32 %v244, 0.0
    %v248 = vpack.c.bf16 %v247, %v247
    %v250 = vperm.slane %v124, 0
    %v268 = vunpack.c.l.b16 %v107
    %v269 = vunpack.c.l.b16 %v108
    %v270 = vunpack.c.l.b16 %v109
    %v271 = vunpack.c.l.b16 %v110
    %v272 = vunpack.c.l.b16 %v111
    %v273 = vunpack.c.l.b16 %v112
    %v274 = vunpack.c.l.b16 %v113
    %v275 = vunpack.c.l.b16 %v114
    %v276 = vunpack.c.l.b16 %v115
    %v277 = vunpack.c.l.b16 %v116
    %v278 = vunpack.c.l.b16 %v117
    %v279 = vunpack.c.l.b16 %v118
    %v280 = vunpack.c.l.b16 %v119
    %v281 = vunpack.c.l.b16 %v120
    %v282 = vunpack.c.l.b16 %v121
    %v283 = vunpack.c.l.b16 %v122
    %v284 = vpack.c.b16 %v269, %v268
    %v285 = vpack.c.b16 %v271, %v270
    %v286 = vpack.c.b16 %v273, %v272
    %v287 = vpack.c.b16 %v275, %v274
    %v288 = vpack.c.b16 %v277, %v276
    %v289 = vpack.c.b16 %v279, %v278
    %v290 = vpack.c.b16 %v281, %v280
    %v291 = vpack.c.b16 %v283, %v282
    %300 = vmatpush.bf16.msra.mxu0 %v291
    %301 = vmatpush.bf16.msra.mxu0 %v290
    %302 = vmatpush.bf16.msra.mxu0 %v289
    %303 = vmatpush.bf16.msra.mxu0 %v288
    %304 = vmatpush.bf16.msra.mxu0 %v287
    %305 = vmatpush.bf16.msra.mxu0 %v286
    %306 = vmatpush.bf16.msra.mxu0 %v285
    %307 = vmatpush.bf16.msra.mxu0 %v284
    %308 = vmatmul.bf16.gmra.mxu0 %v248
    %v309 = vpop.f32.mrf.mxu0
    %v310 = vadd.f32 %v250, %v309
    %v311 = vpop.f32.mrf.mxu0
    %312 = vdwg.mxu0
    %v313 = vmax.f32 %v310, 0.0
    %v314 = vpack.c.bf16 %v313, %v313
    %v316 = vperm.slane %v147, 0
    %v334 = vunpack.c.l.b16 %v131
    %v335 = vunpack.c.l.b16 %v132
    %v336 = vunpack.c.l.b16 %v133
    %v337 = vunpack.c.l.b16 %v134
    %v338 = vunpack.c.l.b16 %v135
    %v339 = vunpack.c.l.b16 %v136
    %v340 = vunpack.c.l.b16 %v137
    %v341 = vunpack.c.l.b16 %v138
    %v342 = vunpack.c.l.b16 %v139
    %v343 = vunpack.c.l.b16 %v140
    %v344 = vunpack.c.l.b16 %v141
    %v345 = vunpack.c.l.b16 %v142
    %v346 = vunpack.c.l.b16 %v143
    %v347 = vunpack.c.l.b16 %v144
    %v348 = vunpack.c.l.b16 %v145
    %v349 = vunpack.c.l.b16 %v146
    %v350 = vpack.c.b16 %v335, %v334
    %v351 = vpack.c.b16 %v337, %v336
    %v352 = vpack.c.b16 %v339, %v338
    %v353 = vpack.c.b16 %v341, %v340
    %v354 = vpack.c.b16 %v343, %v342
    %v355 = vpack.c.b16 %v345, %v344
    %v356 = vpack.c.b16 %v347, %v346
    %v357 = vpack.c.b16 %v349, %v348
    %366 = vmatpush.bf16.msra.mxu0 %v357
    %367 = vmatpush.bf16.msra.mxu0 %v356
    %368 = vmatpush.bf16.msra.mxu0 %v355
    %369 = vmatpush.bf16.msra.mxu0 %v354
    %370 = vmatpush.bf16.msra.mxu0 %v353
    %371 = vmatpush.bf16.msra.mxu0 %v352
    %372 = vmatpush.bf16.msra.mxu0 %v351
    %373 = vmatpush.bf16.msra.mxu0 %v350
    %374 = vmatmul.bf16.gmra.mxu0 %v314
    %v375 = vpop.f32.mrf.mxu0
    %v376 = vadd.f32 %v316, %v375
    %v377 = vpop.f32.mrf.mxu0
    %378 = vdwg.mxu0
    %379 = vst [vmem:[#allocation10] sm:$0xff] %v376
    // Predicated region
    $region46: #{net1_forward.1} parent=1 // pred_check
      _
    $region47: #{net1_forward.1} parent=1 // pred_check_branch
      %381 = sbr.rel (0) target = $region49
    $region48: #{net1_forward.1} parent=1 // pred_region
      %383 = vsyncadd [#allocation4], 0
      %s385 = sshll.u32 [#allocation10], 4
      %s386 = int_to_ptr.vmem [resolvable:$true] %s385
      %s387 = sshll.u32 %s7, 4
      %s388 = int_to_ptr.hbm [resolvable:$true] %s387
      %390 = dma.vmem_to_hbm [thread:$0]  %s386, 128, %s388, [#allocation4]
    $region49: #{net1_forward.1} parent=1 // pred_fallthru
      _
    // Predicated region
    $region50: #{net1_forward.1} parent=1 // pred_check
      _
    $region51: #{net1_forward.1} parent=1 // pred_check_branch
      %392 = sbr.rel (0) target = $region53
    $region52: #{net1_forward.1} parent=1 // pred_region
      %394 = dma.done [#allocation4], 128
    $region53: #{net1_forward.1} parent=1 // pred_fallthru
      _
    %395 = vsyncpa [#allocation3], 1
    %396 = vsyncpa [#allocation6], 1
    %397 = vsyncpa [#allocation9], 1
    %398 = vsyncpa [#allocation4], 1

</llo_original>
